<compile_context>
chip_gen: v5e
topology: v5e:2x2
jax: 0.10.0
libtpu: 0.0.40
codegen_flags: <defaults>
</compile_context>

<pallas_src>
import math

import jax
import jax.numpy as jnp
from jax import lax
from jax.experimental import pallas as pl
from jax.experimental.pallas import tpu as pltpu

_EPS = 1e-5  # torch.nn.BatchNorm2d default


def _bn_tanh_kernel(x_ref, gamma_ref, beta_ref, o_ref):
    # x_ref: (TILE_C, TOTAL) -- one BN channel per row, full reduction width.
    x = x_ref[...].astype(jnp.float32)
    inv_n = 1.0 / float(x.shape[-1])
    mean = jnp.sum(x, axis=-1, keepdims=True) * inv_n
    xc = x - mean
    var = jnp.sum(xc * xc, axis=-1, keepdims=True) * inv_n  # biased var (torch BN)
    inv_std = lax.rsqrt(var + _EPS)
    y = xc * inv_std * gamma_ref[...] + beta_ref[...]
    o_ref[...] = jnp.tanh(y).astype(o_ref.dtype)


def _sigmoid_kernel(x_ref, o_ref):
    x = x_ref[...].astype(jnp.float32)
    o_ref[...] = (1.0 / (1.0 + jnp.exp(-x))).astype(o_ref.dtype)


def bn_tanh_pallas(x0, gamma, beta):
    """BatchNorm2d (batch statistics) + affine + tanh, fused, on the 6-D tensor."""
    shp = x0.shape
    n_prime = shp[0] * shp[1]
    c_prime = shp[2] * shp[3]
    hw = int(math.prod(shp[4:]))
    total = n_prime * hw

    # Channel-major, lane-dense 2-D view: (C', N'*H*W).
    x2d = (x0.reshape(n_prime, c_prime, hw)
              .transpose(1, 0, 2)
              .reshape(c_prime, total))
    g2d = gamma.reshape(c_prime, 1).astype(jnp.float32)
    b2d = beta.reshape(c_prime, 1).astype(jnp.float32)

    tile_c = 8 if c_prime % 8 == 0 else c_prime  # sublane-aligned row tile
    grid = (c_prime // tile_c,)

    out2d = pl.pallas_call(
        _bn_tanh_kernel,
        out_shape=jax.ShapeDtypeStruct((c_prime, total), x0.dtype),
        grid=grid,
        in_specs=[
            pl.BlockSpec((tile_c, total), lambda i: (i, 0)),
            pl.BlockSpec((tile_c, 1), lambda i: (i, 0)),
            pl.BlockSpec((tile_c, 1), lambda i: (i, 0)),
        ],
        out_specs=pl.BlockSpec((tile_c, total), lambda i: (i, 0)),
        compiler_params=pltpu.CompilerParams(
            dimension_semantics=("parallel",)),
    )(x2d, g2d, b2d)

    # TODO(synk): for very large N'*H*W, split the reduction axis into a
    # two-pass (accumulate stats, then normalize) pipeline instead of whole rows.
    return (out2d.reshape(c_prime, n_prime, hw)
                 .transpose(1, 0, 2)
                 .reshape(shp))


def sigmoid_pallas(x1):
    """Elementwise sigmoid over an arbitrary-shaped tensor via a lane-dense view."""
    shp = x1.shape
    total = int(x1.size)
    lanes = 128 if total % 128 == 0 else total
    rows = total // lanes
    x2d = x1.reshape(rows, lanes)

    tile_r = 8 if rows % 8 == 0 else rows
    grid = (rows // tile_r,)

    out2d = pl.pallas_call(
        _sigmoid_kernel,
        out_shape=jax.ShapeDtypeStruct((rows, lanes), x1.dtype),
        grid=grid,
        in_specs=[pl.BlockSpec((tile_r, lanes), lambda i: (i, 0))],
        out_specs=pl.BlockSpec((tile_r, lanes), lambda i: (i, 0)),
        compiler_params=pltpu.CompilerParams(
            dimension_semantics=("parallel",)),
    )(x2d)
    return out2d.reshape(shp)


class BNLayerPallas:
    """Mirrors the PyTorch BNLayer API: lazy init on first call, tuple in/out.

    Note: lazy init / parameter storage is a Python-side eager side effect,
    just like the original module; it will not behave the same if this
    __call__ is traced under jax.jit.
    """

    def __init__(self, func='BatchNorm2d'):
        self.func = func
        self.not_initialized = True

    def __call__(self, x):
        x0, x1 = x[0], x[1]
        shp = x0.shape
        num_features = shp[2] * shp[3]
        if self.not_initialized:
            # Freshly-constructed BatchNorm2d: weight=1, bias=0 (affine=True).
            # TODO(synk): running_mean / running_var bookkeeping is not tracked;
            # it does not affect the training-mode forward output.
            self.gamma = jnp.ones((num_features,), jnp.float32)
            self.beta = jnp.zeros((num_features,), jnp.float32)
            self.not_initialized = False
        xx = bn_tanh_pallas(x0, self.gamma, self.beta)
        yy = sigmoid_pallas(x1)
        return (xx, yy)


if __name__ == "__main__":
    key = jax.random.PRNGKey(0)
    k0, k1 = jax.random.split(key)
    # 6-D capsule pose tensor: (batch=2, caps=4, pose 4x4, spatial 16x16)
    x0 = jax.random.normal(k0, (2, 4, 4, 4, 16, 16), dtype=jnp.float32)
    # activation tensor for the sigmoid branch
    x1 = jax.random.normal(k1, (2, 4, 16, 16), dtype=jnp.float32)

    layer = BNLayerPallas('BatchNorm2d')
    xx, yy = layer((x0, x1))
    xx = jax.block_until_ready(xx)
    yy = jax.block_until_ready(yy)

    # Pure-JAX reference of the PyTorch forward (training-mode batch stats).
    shp = x0.shape
    n_p, c_p = shp[0] * shp[1], shp[2] * shp[3]
    xr = x0.reshape(n_p, c_p, -1)
    mean = xr.mean(axis=(0, 2), keepdims=True)
    var = ((xr - mean) ** 2).mean(axis=(0, 2), keepdims=True)
    ref_xx = jnp.tanh((xr - mean) / jnp.sqrt(var + _EPS)).reshape(shp)
    ref_yy = jax.nn.sigmoid(x1)

    assert xx.shape == shp and yy.shape == x1.shape
    assert jnp.allclose(xx, ref_xx, atol=1e-5, rtol=1e-5)
    assert jnp.allclose(yy, ref_yy, atol=1e-6, rtol=1e-6)

    print("KERNEL_OK")
</pallas_src>

<mosaic_0001>
module attributes {stable_mosaic.version = 11 : i64} {
  func.func @_bn_tanh_kernel(%arg0: i32, %arg1: memref<8x2048xf32, #tpu.memory_space<vmem>>, %arg2: memref<8x1xf32, #tpu.memory_space<vmem>>, %arg3: memref<8x1xf32, #tpu.memory_space<vmem>>, %arg4: memref<8x2048xf32, #tpu.memory_space<vmem>>) attributes {dimension_semantics = [#tpu.dimension_semantics<parallel>], iteration_bounds = array<i64: 2>, scalar_prefetch = 0 : i64, scratch_operands = 0 : i64, tpu.core_type = #tpu.core_type<tc>, window_params = [{transform_indices = @transform_0, window_bounds = array<i64: 8, 2048>}, {transform_indices = @transform_1, window_bounds = array<i64: 8, 1>}, {transform_indices = @transform_2, window_bounds = array<i64: 8, 1>}, {transform_indices = @transform_3, window_bounds = array<i64: 8, 2048>}]} {
    %c0 = arith.constant 0 : index
    %c0_0 = arith.constant 0 : index
    %0 = vector.load %arg1[%c0, %c0_0] : memref<8x2048xf32, #tpu.memory_space<vmem>>, vector<8x2048xf32>
    %cst = arith.constant dense<0.000000e+00> : vector<8xf32>
    %1 = vector.multi_reduction <add>, %0, %cst [1] : vector<8x2048xf32> to vector<8xf32>
    %2 = vector.shape_cast %1 : vector<8xf32> to vector<8x1xf32>
    %cst_1 = arith.constant 4.8828125E-4 : f32
    %3 = vector.broadcast %cst_1 : f32 to vector<8x1xf32>
    %4 = arith.mulf %2, %3 : vector<8x1xf32>
    %5 = vector.broadcast %4 : vector<8x1xf32> to vector<8x2048xf32>
    %6 = arith.subf %0, %5 : vector<8x2048xf32>
    %7 = arith.mulf %6, %6 : vector<8x2048xf32>
    %cst_2 = arith.constant dense<0.000000e+00> : vector<8xf32>
    %8 = vector.multi_reduction <add>, %7, %cst_2 [1] : vector<8x2048xf32> to vector<8xf32>
    %9 = vector.shape_cast %8 : vector<8xf32> to vector<8x1xf32>
    %cst_3 = arith.constant 4.8828125E-4 : f32
    %10 = vector.broadcast %cst_3 : f32 to vector<8x1xf32>
    %11 = arith.mulf %9, %10 : vector<8x1xf32>
    %cst_4 = arith.constant 9.99999974E-6 : f32
    %12 = vector.broadcast %cst_4 : f32 to vector<8x1xf32>
    %13 = arith.addf %11, %12 : vector<8x1xf32>
    %14 = math.rsqrt %13 : vector<8x1xf32>
    %15 = vector.broadcast %14 : vector<8x1xf32> to vector<8x2048xf32>
    %16 = arith.mulf %6, %15 : vector<8x2048xf32>
    %c0_5 = arith.constant 0 : index
    %c0_6 = arith.constant 0 : index
    %17 = vector.load %arg2[%c0_5, %c0_6] : memref<8x1xf32, #tpu.memory_space<vmem>>, vector<8x1xf32>
    %18 = vector.broadcast %17 : vector<8x1xf32> to vector<8x2048xf32>
    %19 = arith.mulf %16, %18 : vector<8x2048xf32>
    %c0_7 = arith.constant 0 : index
    %c0_8 = arith.constant 0 : index
    %20 = vector.load %arg3[%c0_7, %c0_8] : memref<8x1xf32, #tpu.memory_space<vmem>>, vector<8x1xf32>
    %21 = vector.broadcast %20 : vector<8x1xf32> to vector<8x2048xf32>
    %22 = arith.addf %19, %21 : vector<8x2048xf32>
    %23 = math.tanh %22 : vector<8x2048xf32>
    %c0_9 = arith.constant 0 : index
    %c0_10 = arith.constant 0 : index
    %24 = vector.load %arg4[%c0_9, %c0_10] : memref<8x2048xf32, #tpu.memory_space<vmem>>, vector<8x2048xf32>
    tpu.vector_store %arg4[%c0_9, %c0_10], %23 {strides = array<i32>} : memref<8x2048xf32, #tpu.memory_space<vmem>>, vector<8x2048xf32>,
    return
  }
  func.func @transform_0(%arg0: i32) -> (i32, i32) {
    %c0_i32 = arith.constant 0 : i32
    %c0_i32_0 = arith.constant 0 : i32
    return %arg0, %c0_i32 : i32, i32
  }
  func.func @transform_1(%arg0: i32) -> (i32, i32) {
    %c0_i32 = arith.constant 0 : i32
    %c0_i32_0 = arith.constant 0 : i32
    return %arg0, %c0_i32 : i32, i32
  }
  func.func @transform_2(%arg0: i32) -> (i32, i32) {
    %c0_i32 = arith.constant 0 : i32
    %c0_i32_0 = arith.constant 0 : i32
    return %arg0, %c0_i32 : i32, i32
  }
  func.func @transform_3(%arg0: i32) -> (i32, i32) {
    %c0_i32 = arith.constant 0 : i32
    %c0_i32_0 = arith.constant 0 : i32
    return %arg0, %c0_i32 : i32, i32
  }
}

</mosaic_0001>

<llo_original>
// kernel: tpu_custom_call.1
$region0: #{tpu_custom_call.1}
  #allocation0 [shape = 'u32[]', space=smem, size = 0x4, offset = 0x4, fixed_abs, tag = 'smem constant byte address 0x4 - core index']
  #allocation1 [shape = 'u32[72,128]{1,0:T(1,128)}', space=vmem, size = 0x9000, scoped, tag = 'internal scratch']
  %s0 = inlined_call_operand.hbm [shape: f32[16,2048], index: 0, kind: input, shape index: {}]
  %s1 = inlined_call_operand.vmem [shape: f32[16,1], index: 1, kind: input, shape index: {}]
  %s2 = inlined_call_operand.vmem [shape: f32[16,1], index: 2, kind: input, shape index: {}]
  %s3 = inlined_call_operand.hbm [shape: f32[16,2048], index: 3, kind: output, shape index: {}]
  %s4 = sld [smem:[#allocation0]]
  $region49: #{tpu_custom_call.1} parent=0
    _
  %s6 = ssub.s32 1, %s4
  %s7 = scalar_select 0, %s6, %s4
  $region1: #{tpu_custom_call.1} parent=0
    #allocation2 [shape = 'u8[131072]{0}', space=vmem, size = 0x20000, scoped, tag = 'input window, operand 0']
    #allocation3 [shape = 's32[2]{0}', space=sflag, size = 0x8, scoped, tag = 'scoped memory for tpu_custom_call.1']
    #allocation4 [shape = 's32[2]{0}', space=sflag, size = 0x8, scoped, tag = 'scoped memory for tpu_custom_call.1']
    #allocation5 [shape = 'u8[131072]{0}', space=vmem, size = 0x20000, scoped, tag = 'output window, operand 0']
    %8 = vsyncpa [#allocation3], 0
    %s9 = scalar_lea.sflag [#allocation3], 1
    %10 = vsyncpa %s9, 0
    %11 = vsyncpa [#allocation4], 0
    %s12 = scalar_lea.sflag [#allocation4], 1
    %13 = vsyncpa %s12, 0
    loop: start=0, step=1, limit=4
    $region2: #{tpu_custom_call.1} parent=1 // loop_pre_header
      _
    $region3: #{tpu_custom_call.1} parent=1 // loop_header
      %s15 = sphi 0, %s19
      %p16 = scmp.ge.s32.totalorder %s15, 4
      %s25 = sphi 0, %s27
      %s28 = sphi 0, %s25
      %s29 = sphi 0, %s28
      %s45 = sphi 0, %s29
      %s51 = sphi 0, %s53
      %s54 = sphi 0, %s51
      %s55 = sphi 0, %s54
      %s71 = sphi 0, %s55
      %s77 = sphi 0, %s79
      %s80 = sphi 0, %s77
      %s81 = sphi 0, %s80
      %s97 = sphi 0, %s81
      %s103 = sphi 0, %s105
      %s106 = sphi 0, %s103
      %s107 = sphi 0, %s106
      %s123 = sphi 0, %s107
    $region4: #{tpu_custom_call.1} parent=1 // loop_header_branch
      %18 = sbr.rel (%p16) target = $region8
    $region5: #{tpu_custom_call.1} parent=1 // loop_body
      %s20 = ssub.s32 %s15, 1
      %s21 = ssub.s32 %s15, 2
      %s22 = sadd.s32 %s15, 1
      %s23 = ssub.s32 %s15, %s22
      %p24 = scmp.eq.s32.totalorder %s23, 0
      %s26 = sadd.s32 %s25, 1
      %s27 = scalar_select %p24, %s25, %s26
      %p30 = pneg %p24
      %p31 = scmp.eq.s32.totalorder %s15, 1
      %p32 = por %p30, %p31
      %p33 = scmp.ne.s32.totalorder %s25, %s28
      %p34 = scmp.eq.s32.totalorder %s15, 0
      %p35 = por %p33, %p34
      %p36 = scmp.ne.s32.totalorder %s25, %s28
      %p37 = scmp.eq.s32.totalorder %s20, 1
      %p38 = por %p36, %p37
      %p39 = scmp.ne.s32.totalorder %s28, %s29
      %p40 = scmp.eq.s32.totalorder %s20, 0
      %p41 = por %p39, %p40
      %p42 = scmp.ne.s32.totalorder %s28, %s29
      %p43 = scmp.eq.s32.totalorder %s21, 1
      %p44 = por %p42, %p43
      %p46 = scmp.ne.s32.totalorder %s29, %s45
      %p47 = scmp.eq.s32.totalorder %s21, 0
      %p48 = por %p46, %p47
      %s49 = ssub.s32 %s15, %s22
      %p50 = scmp.eq.s32.totalorder %s49, 0
      %s52 = sadd.s32 %s51, 1
      %s53 = scalar_select %p50, %s51, %s52
      %p56 = pneg %p50
      %p57 = scmp.eq.s32.totalorder %s15, 1
      %p58 = por %p56, %p57
      %p59 = scmp.ne.s32.totalorder %s51, %s54
      %p60 = scmp.eq.s32.totalorder %s15, 0
      %p61 = por %p59, %p60
      %p62 = scmp.ne.s32.totalorder %s51, %s54
      %p63 = scmp.eq.s32.totalorder %s20, 1
      %p64 = por %p62, %p63
      %p65 = scmp.ne.s32.totalorder %s54, %s55
      %p66 = scmp.eq.s32.totalorder %s20, 0
      %p67 = por %p65, %p66
      %p68 = scmp.ne.s32.totalorder %s54, %s55
      %p69 = scmp.eq.s32.totalorder %s21, 1
      %p70 = por %p68, %p69
      %p72 = scmp.ne.s32.totalorder %s55, %s71
      %p73 = scmp.eq.s32.totalorder %s21, 0
      %p74 = por %p72, %p73
      %s75 = ssub.s32 %s15, %s22
      %p76 = scmp.eq.s32.totalorder %s75, 0
      %s78 = sadd.s32 %s77, 1
      %s79 = scalar_select %p76, %s77, %s78
      %p82 = pneg %p76
      %p83 = scmp.eq.s32.totalorder %s15, 1
      %p84 = por %p82, %p83
      %p85 = scmp.ne.s32.totalorder %s77, %s80
      %p86 = scmp.eq.s32.totalorder %s15, 0
      %p87 = por %p85, %p86
      %p88 = scmp.ne.s32.totalorder %s77, %s80
      %p89 = scmp.eq.s32.totalorder %s20, 1
      %p90 = por %p88, %p89
      %p91 = scmp.ne.s32.totalorder %s80, %s81
      %p92 = scmp.eq.s32.totalorder %s20, 0
      %p93 = por %p91, %p92
      %p94 = scmp.ne.s32.totalorder %s80, %s81
      %p95 = scmp.eq.s32.totalorder %s21, 1
      %p96 = por %p94, %p95
      %p98 = scmp.ne.s32.totalorder %s81, %s97
      %p99 = scmp.eq.s32.totalorder %s21, 0
      %p100 = por %p98, %p99
      %s101 = ssub.s32 %s15, %s22
      %p102 = scmp.eq.s32.totalorder %s101, 0
      %s104 = sadd.s32 %s103, 1
      %s105 = scalar_select %p102, %s103, %s104
      %p108 = pneg %p102
      %p109 = scmp.eq.s32.totalorder %s15, 1
      %p110 = por %p108, %p109
      %p111 = scmp.ne.s32.totalorder %s103, %s106
      %p112 = scmp.eq.s32.totalorder %s15, 0
      %p113 = por %p111, %p112
      %p114 = scmp.ne.s32.totalorder %s103, %s106
      %p115 = scmp.eq.s32.totalorder %s20, 1
      %p116 = por %p114, %p115
      %p117 = scmp.ne.s32.totalorder %s106, %s107
      %p118 = scmp.eq.s32.totalorder %s20, 0
      %p119 = por %p117, %p118
      %p120 = scmp.ne.s32.totalorder %s106, %s107
      %p121 = scmp.eq.s32.totalorder %s21, 1
      %p122 = por %p120, %p121
      %p124 = scmp.ne.s32.totalorder %s107, %s123
      %p125 = scmp.eq.s32.totalorder %s21, 0
      %p126 = por %p124, %p125
      %p127 = scmp.le.s32.totalorder 1, %s15
      %p128 = scmp.lt.s32.totalorder %s15, 3
      %p129 = pnand %p127, %p128
      %p130 = pneg %p129
      // Predicated region
      $region9: #{tpu_custom_call.1} parent=5 // pred_check
        _
      $region10: #{tpu_custom_call.1} parent=5 // pred_check_branch
        %132 = sbr.rel (%p129) target = $region12
      $region11: #{tpu_custom_call.1} parent=5 // pred_region
        %s133 = ssub.s32 %s15, 1
      $region12: #{tpu_custom_call.1} parent=5 // pred_fallthru
        _
      %p134 = scmp.lt.s32.totalorder %s15, 2
      // Predicated region
      $region13: #{tpu_custom_call.1} parent=5 // pred_check
        %p135 = pneg %p134
      $region14: #{tpu_custom_call.1} parent=5 // pred_check_branch
        %137 = sbr.rel (%p135) target = $region16
      $region15: #{tpu_custom_call.1} parent=5 // pred_region
        // Predicated region
        $region17: #{tpu_custom_call.1} parent=15 // pred_check
          %p138 = pneg %p35
        $region18: #{tpu_custom_call.1} parent=15 // pred_check_branch
          %140 = sbr.rel (%p138) target = $region20
        $region19: #{tpu_custom_call.1} parent=15 // pred_region
          %s141 = sand.u32 %s25, 1
          %s142 = scalar_lea.sflag [#allocation3], %s141
          %s143 = sand.u32 %s25, 1
          %s144 = smul.addr %s143, 128
          %s145 = scalar_lea.vmem [#allocation2], %s144
          %147 = vsyncadd %s142, 0
          %s148 = smul.addr %s15, 16
          %s149 = smul.addr %s148, 8
          %s150 = scalar_lea.hbm %s0, %s149
          %s152 = sshll.u32 %s150, 4
          %s153 = int_to_ptr.hbm [resolvable:$true] %s152
          %s154 = sshll.u32 %s145, 4
          %s155 = int_to_ptr.vmem [resolvable:$true] %s154
          %157 = dma.hbm_to_vmem [thread:$0]  %s153, 2048, %s155, %s142
        $region20: #{tpu_custom_call.1} parent=15 // pred_fallthru
          _
        // Predicated region
        $region21: #{tpu_custom_call.1} parent=15 // pred_check
          %p158 = pneg %p61
        $region22: #{tpu_custom_call.1} parent=15 // pred_check_branch
          %160 = sbr.rel (%p158) target = $region24
        $region23: #{tpu_custom_call.1} parent=15 // pred_region
          %p161 = scmp.lt.s32.totalorder %s15, 1
          %s162 = scalar_select %p161, %s15, 1
          %s163 = smul.addr %s162, 8
          %s164 = scalar_lea.vmem %s1, %s163
        $region24: #{tpu_custom_call.1} parent=15 // pred_fallthru
          _
        // Predicated region
        $region25: #{tpu_custom_call.1} parent=15 // pred_check
          %p165 = pneg %p87
        $region26: #{tpu_custom_call.1} parent=15 // pred_check_branch
          %167 = sbr.rel (%p165) target = $region28
        $region27: #{tpu_custom_call.1} parent=15 // pred_region
          %p168 = scmp.lt.s32.totalorder %s15, 1
          %s169 = scalar_select %p168, %s15, 1
          %s170 = smul.addr %s169, 8
          %s171 = scalar_lea.vmem %s2, %s170
        $region28: #{tpu_custom_call.1} parent=15 // pred_fallthru
          _
      $region16: #{tpu_custom_call.1} parent=5 // pred_fallthru
        _
      %p172 = scmp.le.s32.totalorder 1, %s15
      %p173 = scmp.lt.s32.totalorder %s15, 3
      %p174 = pnand %p172, %p173
      %p175 = pneg %p174
      // Predicated region
      $region29: #{tpu_custom_call.1} parent=5 // pred_check
        _
      $region30: #{tpu_custom_call.1} parent=5 // pred_check_branch
        %177 = sbr.rel (%p174) target = $region32
      $region31: #{tpu_custom_call.1} parent=5 // pred_region
        %s178 = ssub.s32 %s15, 1
        %s179 = sand.u32 %s28, 1
        %s180 = scalar_lea.sflag [#allocation3], %s179
        %s181 = sand.u32 %s28, 1
        %s182 = smul.addr %s181, 128
        %s183 = scalar_lea.vmem [#allocation2], %s182
        // Predicated region
        $region33: #{tpu_custom_call.1} parent=31 // pred_check
          %p184 = pneg %p41
        $region34: #{tpu_custom_call.1} parent=31 // pred_check_branch
          %186 = sbr.rel (%p184) target = $region36
        $region35: #{tpu_custom_call.1} parent=31 // pred_region
          %188 = dma.done %s180, 2048
        $region36: #{tpu_custom_call.1} parent=31 // pred_fallthru
          _
        %s189 = sand.u32 %s28, 1
        %s190 = scalar_lea.sflag [#allocation3], %s189
        %s191 = sand.u32 %s28, 1
        %s192 = smul.addr %s191, 128
        %s193 = scalar_lea.vmem [#allocation2], %s192
        %p194 = pneg %p41
        %p195 = pneg %p38
        %p196 = scmp.lt.s32.totalorder %s20, 1
        %s197 = scalar_select %p196, %s20, 1
        %s198 = smul.addr %s197, 8
        %s199 = scalar_lea.vmem %s1, %s198
        %p200 = pneg %p67
        %p201 = pneg %p64
        %p202 = scmp.lt.s32.totalorder %s20, 1
        %s203 = scalar_select %p202, %s20, 1
        %s204 = smul.addr %s203, 8
        %s205 = scalar_lea.vmem %s2, %s204
        %p206 = pneg %p93
        %p207 = pneg %p90
        %p208 = pneg %p119
        %p209 = pneg %p116
        %s210 = sand.u32 %s106, 1
        %s211 = scalar_lea.sflag [#allocation4], %s210
        %s212 = sand.u32 %s106, 1
        %s213 = smul.addr %s212, 128
        %s214 = scalar_lea.vmem [#allocation5], %s213
        %p215 = scmp.lt.s32.totalorder %s20, 1
        %s216 = scalar_select %p215, %s20, 1
        %s217 = smul.addr %s216, 8
        %s218 = scalar_lea.vmem %s1, %s217
        %p219 = scmp.lt.s32.totalorder %s20, 1
        %s220 = scalar_select %p219, %s20, 1
        %s221 = smul.addr %s220, 8
        %s222 = scalar_lea.vmem %s2, %s221
        %v223 = vld [vmem:[%s183] sm:$0xff]
        %v224 = vld [vmem:[%s183 + $0x8] sm:$0xff]
        %v225 = vld [vmem:[%s183 + $0x10] sm:$0xff]
        %v226 = vld [vmem:[%s183 + $0x18] sm:$0xff]
        %v227 = vld [vmem:[%s183 + $0x20] sm:$0xff]
        %v228 = vld [vmem:[%s183 + $0x28] sm:$0xff]
        %v229 = vld [vmem:[%s183 + $0x30] sm:$0xff]
        %v230 = vld [vmem:[%s183 + $0x38] sm:$0xff]
        %v231 = vld [vmem:[%s183 + $0x40] sm:$0xff]
        %v232 = vld [vmem:[%s183 + $0x48] sm:$0xff]
        %v233 = vld [vmem:[%s183 + $0x50] sm:$0xff]
        %v234 = vld [vmem:[%s183 + $0x58] sm:$0xff]
        %v235 = vld [vmem:[%s183 + $0x60] sm:$0xff]
        %v236 = vld [vmem:[%s183 + $0x68] sm:$0xff]
        %v237 = vld [vmem:[%s183 + $0x70] sm:$0xff]
        %v238 = vld [vmem:[%s183 + $0x78] sm:$0xff]
        %v239 = vadd.f32 %v223, %v224
        %v240 = vadd.f32 %v239, %v225
        %v241 = vadd.f32 %v240, %v226
        %v242 = vadd.f32 %v241, %v227
        %v243 = vadd.f32 %v242, %v228
        %v244 = vadd.f32 %v243, %v229
        %v245 = vadd.f32 %v244, %v230
        %v246 = vadd.f32 %v245, %v231
        %v247 = vadd.f32 %v246, %v232
        %v248 = vadd.f32 %v247, %v233
        %v249 = vadd.f32 %v248, %v234
        %v250 = vadd.f32 %v249, %v235
        %v251 = vadd.f32 %v250, %v236
        %v252 = vadd.f32 %v251, %v237
        %v253 = vadd.f32 %v252, %v238
        %254 = vadd.xlane.f32.xlu0 %v253
        %v255 = vpop.xlane.xlu0 %254
        %v256 = vmul.f32 %v255, 0.00048828125
        %v257 = vsub.f32 %v223, %v256
        %v258 = vsub.f32 %v224, %v256
        %v259 = vsub.f32 %v225, %v256
        %v260 = vsub.f32 %v226, %v256
        %v261 = vsub.f32 %v227, %v256
        %v262 = vsub.f32 %v228, %v256
        %v263 = vsub.f32 %v229, %v256
        %v264 = vsub.f32 %v230, %v256
        %v265 = vsub.f32 %v231, %v256
        %v266 = vsub.f32 %v232, %v256
        %v267 = vsub.f32 %v233, %v256
        %v268 = vsub.f32 %v234, %v256
        %v269 = vsub.f32 %v235, %v256
        %v270 = vsub.f32 %v236, %v256
        %v271 = vsub.f32 %v237, %v256
        %v272 = vsub.f32 %v238, %v256
        %v273 = vmul.f32 %v257, %v257
        %v274 = vmul.f32 %v258, %v258
        %v275 = vmul.f32 %v259, %v259
        %v276 = vmul.f32 %v260, %v260
        %v277 = vmul.f32 %v261, %v261
        %v278 = vmul.f32 %v262, %v262
        %v279 = vmul.f32 %v263, %v263
        %v280 = vmul.f32 %v264, %v264
        %v281 = vmul.f32 %v265, %v265
        %v282 = vmul.f32 %v266, %v266
        %v283 = vmul.f32 %v267, %v267
        %v284 = vmul.f32 %v268, %v268
        %v285 = vmul.f32 %v269, %v269
        %v286 = vmul.f32 %v270, %v270
        %v287 = vmul.f32 %v271, %v271
        %v288 = vmul.f32 %v272, %v272
        %v289 = vadd.f32 %v273, %v274
        %v290 = vadd.f32 %v289, %v275
        %v291 = vadd.f32 %v290, %v276
        %v292 = vadd.f32 %v291, %v277
        %v293 = vadd.f32 %v292, %v278
        %v294 = vadd.f32 %v293, %v279
        %v295 = vadd.f32 %v294, %v280
        %v296 = vadd.f32 %v295, %v281
        %v297 = vadd.f32 %v296, %v282
        %v298 = vadd.f32 %v297, %v283
        %v299 = vadd.f32 %v298, %v284
        %v300 = vadd.f32 %v299, %v285
        %v301 = vadd.f32 %v300, %v286
        %v302 = vadd.f32 %v301, %v287
        %v303 = vadd.f32 %v302, %v288
        %304 = vadd.xlane.f32.xlu0 %v303
        %v305 = vpop.xlane.xlu0 %304
        %v306 = vmul.f32 %v305, 0.00048828125
        %v307 = vadd.f32 %v306, 1e-05
        %v308 = vrsqrt.pop %v307
        %v309 = vmul.f32 %v308, %v307
        %v310 = vmul.f32 %v309, %v308
        %v311 = vmul.f32 0.5, %v310
        %v312 = vsub.f32 1.5, %v311
        %v313 = vmul.f32 %v308, %v312
        %vm314 = vweird.f32 %v307
        %vm315 = vweird.f32 %v308
        %vm316 = vmor %vm314, %vm315
        %v317 = vsel %vm316, %v308, %v313
        %v318 = vmul.f32 %v257, %v317
        %v319 = vmul.f32 %v258, %v317
        %v320 = vmul.f32 %v259, %v317
        %v321 = vmul.f32 %v260, %v317
        %v322 = vmul.f32 %v261, %v317
        %v323 = vmul.f32 %v262, %v317
        %v324 = vmul.f32 %v263, %v317
        %v325 = vmul.f32 %v264, %v317
        %v326 = vmul.f32 %v265, %v317
        %v327 = vmul.f32 %v266, %v317
        %v328 = vmul.f32 %v267, %v317
        %v329 = vmul.f32 %v268, %v317
        %v330 = vmul.f32 %v269, %v317
        %v331 = vmul.f32 %v270, %v317
        %v332 = vmul.f32 %v271, %v317
        %v333 = vmul.f32 %v272, %v317
        %v334 = vld [vmem:[%s218] sm:$0xff]
        %336 = vset.pattern.permute.xlu0 0
        %337 = vperm.xlu0 %336, %v334
        %v338 = vpop.permute.xlu0 %337
        %v340 = vmul.f32 %v318, %v338
        %v341 = vmul.f32 %v319, %v338
        %v342 = vmul.f32 %v320, %v338
        %v343 = vmul.f32 %v321, %v338
        %v344 = vmul.f32 %v322, %v338
        %v345 = vmul.f32 %v323, %v338
        %v346 = vmul.f32 %v324, %v338
        %v347 = vmul.f32 %v325, %v338
        %v348 = vmul.f32 %v326, %v338
        %v349 = vmul.f32 %v327, %v338
        %v350 = vmul.f32 %v328, %v338
        %v351 = vmul.f32 %v329, %v338
        %v352 = vmul.f32 %v330, %v338
        %v353 = vmul.f32 %v331, %v338
        %v354 = vmul.f32 %v332, %v338
        %v355 = vmul.f32 %v333, %v338
        %v356 = vld [vmem:[%s222] sm:$0xff]
        %358 = vset.pattern.permute.xlu0 0
        %359 = vperm.xlu0 %358, %v356
        %v360 = vpop.permute.xlu0 %359
        %v362 = vadd.f32 %v340, %v360
        %v363 = vadd.f32 %v341, %v360
        %v364 = vadd.f32 %v342, %v360
        %v365 = vadd.f32 %v343, %v360
        %v366 = vadd.f32 %v344, %v360
        %v367 = vadd.f32 %v345, %v360
        %v368 = vadd.f32 %v346, %v360
        %v369 = vadd.f32 %v347, %v360
        %v370 = vadd.f32 %v348, %v360
        %v371 = vadd.f32 %v349, %v360
        %v372 = vadd.f32 %v350, %v360
        %v373 = vadd.f32 %v351, %v360
        %v374 = vadd.f32 %v352, %v360
        %v375 = vadd.f32 %v353, %v360
        %v376 = vadd.f32 %v354, %v360
        %v377 = vadd.f32 %v355, %v360
        %v378 = vtanh.pop %v362
        %v379 = vtanh.pop %v363
        %v380 = vtanh.pop %v364
        %v381 = vtanh.pop %v365
        %v382 = vtanh.pop %v366
        %v383 = vtanh.pop %v367
        %v384 = vtanh.pop %v368
        %v385 = vtanh.pop %v369
        %v386 = vtanh.pop %v370
        %v387 = vtanh.pop %v371
        %v388 = vtanh.pop %v372
        %v389 = vtanh.pop %v373
        %v390 = vtanh.pop %v374
        %v391 = vtanh.pop %v375
        %v392 = vtanh.pop %v376
        %v393 = vtanh.pop %v377
        %394 = vst [vmem:[%s214] sm:$0xff] %v378
        %395 = vst [vmem:[%s214 + $0x8] sm:$0xff] %v379
        %396 = vst [vmem:[%s214 + $0x10] sm:$0xff] %v380
        %397 = vst [vmem:[%s214 + $0x18] sm:$0xff] %v381
        %398 = vst [vmem:[%s214 + $0x20] sm:$0xff] %v382
        %399 = vst [vmem:[%s214 + $0x28] sm:$0xff] %v383
        %400 = vst [vmem:[%s214 + $0x30] sm:$0xff] %v384
        %401 = vst [vmem:[%s214 + $0x38] sm:$0xff] %v385
        %402 = vst [vmem:[%s214 + $0x40] sm:$0xff] %v386
        %403 = vst [vmem:[%s214 + $0x48] sm:$0xff] %v387
        %404 = vst [vmem:[%s214 + $0x50] sm:$0xff] %v388
        %405 = vst [vmem:[%s214 + $0x58] sm:$0xff] %v389
        %406 = vst [vmem:[%s214 + $0x60] sm:$0xff] %v390
        %407 = vst [vmem:[%s214 + $0x68] sm:$0xff] %v391
        %408 = vst [vmem:[%s214 + $0x70] sm:$0xff] %v392
        %409 = vst [vmem:[%s214 + $0x78] sm:$0xff] %v393
        %s410 = sand.u32 %s106, 1
        %s411 = scalar_lea.sflag [#allocation4], %s410
        %s412 = sand.u32 %s106, 1
        %s413 = smul.addr %s412, 128
        %s414 = scalar_lea.vmem [#allocation5], %s413
        // Predicated region
        $region37: #{tpu_custom_call.1} parent=31 // pred_check
          %p415 = pneg %p116
        $region38: #{tpu_custom_call.1} parent=31 // pred_check_branch
          %417 = sbr.rel (%p415) target = $region40
        $region39: #{tpu_custom_call.1} parent=31 // pred_region
          %419 = vsyncadd %s411, 0
          %s420 = smul.addr %s20, 16
          %s421 = smul.addr %s420, 8
          %s422 = scalar_lea.hbm %s3, %s421
          %s424 = sshll.u32 %s414, 4
          %s425 = int_to_ptr.vmem [resolvable:$true] %s424
          %s426 = sshll.u32 %s422, 4
          %s427 = int_to_ptr.hbm [resolvable:$true] %s426
          %429 = dma.vmem_to_hbm [thread:$0]  %s425, 2048, %s427, %s411
        $region40: #{tpu_custom_call.1} parent=31 // pred_fallthru
          _
      $region32: #{tpu_custom_call.1} parent=5 // pred_fallthru
        _
      %p430 = scmp.le.s32.totalorder 2, %s15
      // Predicated region
      $region41: #{tpu_custom_call.1} parent=5 // pred_check
        %p431 = pneg %p430
      $region42: #{tpu_custom_call.1} parent=5 // pred_check_branch
        %433 = sbr.rel (%p431) target = $region44
      $region43: #{tpu_custom_call.1} parent=5 // pred_region
        %s434 = ssub.s32 %s15, 2
        // Predicated region
        $region45: #{tpu_custom_call.1} parent=43 // pred_check
          %p435 = pneg %p122
        $region46: #{tpu_custom_call.1} parent=43 // pred_check_branch
          %437 = sbr.rel (%p435) target = $region48
        $region47: #{tpu_custom_call.1} parent=43 // pred_region
          %s438 = sand.u32 %s107, 1
          %s439 = scalar_lea.sflag [#allocation4], %s438
          %s440 = sand.u32 %s107, 1
          %s441 = smul.addr %s440, 128
          %s442 = scalar_lea.vmem [#allocation5], %s441
          %444 = dma.done %s439, 2048
        $region48: #{tpu_custom_call.1} parent=43 // pred_fallthru
          _
      $region44: #{tpu_custom_call.1} parent=5 // pred_fallthru
        _
    $region6: #{tpu_custom_call.1} parent=1 // loop_footer
      %s19 = sadd.s32 1, %s15
    $region7: #{tpu_custom_call.1} parent=1 // loop_footer_branch
      %14 = sbr.rel target = $region3
    $region8: #{tpu_custom_call.1} parent=1 // loop_exit
      _
    %445 = vsyncpa [#allocation3], 1
    %s446 = scalar_lea.sflag [#allocation3], 1
    %447 = vsyncpa %s446, 1
    %448 = vsyncpa [#allocation4], 1
    %s449 = scalar_lea.sflag [#allocation4], 1
    %450 = vsyncpa %s449, 1

</llo_original>
